<compile_context>
chip_gen: v6e
topology: v6e:2x2x1
jax: 0.10.0
libtpu: 0.0.40
codegen_flags: <defaults>
</compile_context>

<pallas_src>
import jax
import jax.numpy as jnp
from jax.experimental import pallas as pl
from jax.experimental.pallas import tpu as pltpu


def _make_layernorm_kernel(n, eps):
    """One grid step == TB samples, each laid out as an (R, LANE) slab."""
    inv_n = 1.0 / n
    inv_nm1 = 1.0 / max(n - 1, 1)

    def kernel(x_ref, g_ref, b_ref, o_ref):
        x = x_ref[...].astype(jnp.float32)                        # (TB, R, LANE)

        # Pass 1: per-sample mean (XLU reduction; free filler in a mem-bound kernel).
        mean = jnp.sum(x, axis=(1, 2), keepdims=True) * inv_n     # (TB, 1, 1)

        # Pass 2: numerically-stable centered, UNBIASED variance (matches torch .std()).
        d = x - mean
        var = jnp.sum(d * d, axis=(1, 2), keepdims=True) * inv_nm1
        inv = 1.0 / (jnp.sqrt(var) + eps)                         # torch: (x-mean)/(std+eps)

        y = d * inv                                               # (TB, R, LANE)
        # gamma/beta pre-broadcast to the full per-sample (R, LANE) slab in the
        # wrapper: plain elementwise mul/add here, broadcast only over TB.
        y = y * g_ref[...] + b_ref[...]
        o_ref[...] = y.astype(o_ref.dtype)

    return kernel


def _pick_samples_per_block(n_samples, sample_bytes, target_bytes=2 << 20):
    """Largest divisor of n_samples keeping the block near target_bytes,
    preferring >= 2 grid steps so the 'parallel' axis can use both v7x cores."""
    cap = max(1, target_bytes // max(sample_bytes, 1))
    divisors = [d for d in range(1, n_samples + 1)
                if n_samples % d == 0 and d <= cap]
    if not divisors:
        return 1
    preferred = [d for d in divisors if n_samples // d >= 2]
    return max(preferred) if preferred else max(divisors)


def layer_norm(x, gamma=None, beta=None, *, eps=1e-5):
    """Pallas TPU LayerNorm matching the PyTorch module.

    x: (N, C, *spatial) array (e.g. NCHW).  gamma/beta: (C,) or None.
    """
    assert x.ndim >= 2, "expected (N, C, ...) input"
    orig_shape = x.shape
    N, C = orig_shape[0], orig_shape[1]
    F = 1
    for d in orig_shape[2:]:
        F *= d
    F = max(F, 1)
    L = C * F

    # Defaults handled independently (fixes gamma-given/beta-None bug).
    if gamma is None:
        gamma = jnp.ones((C,), jnp.float32)
    if beta is None:
        beta = jnp.zeros((C,), jnp.float32)

    # Per-channel affine pre-broadcast over spatial dims, then re-laid-out
    # exactly like the activations so the kernel does a plain elementwise op.
    gamma_cf = jnp.broadcast_to(jnp.asarray(gamma, jnp.float32).reshape(C, 1), (C, F))
    beta_cf = jnp.broadcast_to(jnp.asarray(beta, jnp.float32).reshape(C, 1), (C, F))

    # Lane-dense per-sample slab: (R, 128) fully packs f32 vregs and guarantees
    # unmasked full-lane stores.  Fallback (C, F) when L is not 128-aligned.
    if L % 128 == 0:
        LANE = 128
        R = L // 128
    else:
        LANE = F
        R = C
    x3 = x.reshape(N, R, LANE)
    g2 = gamma_cf.reshape(R, LANE)
    b2 = beta_cf.reshape(R, LANE)

    itemsize = jnp.dtype(x.dtype).itemsize
    sample_bytes = R * LANE * itemsize
    TB = _pick_samples_per_block(N, sample_bytes)
    # TODO(synk): if a single (TB, R, LANE) block cannot fit VMEM (huge samples),
    # switch to an F-tiled two-pass reduce + normalize path.

    kernel = _make_layernorm_kernel(L, float(eps))

    # Double-buffered in + out blocks + resident gamma/beta (+ slack), capped at
    # 48 MiB so it stays legal on v7x (64 MiB VMEM) while raising v5e's default.
    block_bytes = TB * R * LANE * max(itemsize, 4)
    vmem_limit = int(min(max(4 * block_bytes + 2 * R * LANE * 4 + (4 << 20),
                             32 << 20),
                         48 << 20))

    cost = pl.CostEstimate(
        flops=7 * N * L,
        transcendentals=2 * N,                      # sqrt + divide per sample
        bytes_accessed=2 * N * L * itemsize + 2 * R * LANE * 4,
    )

    out = pl.pallas_call(
        kernel,
        out_shape=jax.ShapeDtypeStruct((N, R, LANE), x.dtype),
        grid_spec=pltpu.PrefetchScalarGridSpec(
            num_scalar_prefetch=0,
            grid=(N // TB,),
            in_specs=[
                pl.BlockSpec((TB, R, LANE), lambda i: (i, 0, 0)),   # TB samples
                pl.BlockSpec((R, LANE), lambda i: (0, 0)),          # gamma (resident)
                pl.BlockSpec((R, LANE), lambda i: (0, 0)),          # beta  (resident)
            ],
            out_specs=pl.BlockSpec((TB, R, LANE), lambda i: (i, 0, 0)),
        ),
        compiler_params=pltpu.CompilerParams(
            dimension_semantics=("parallel",),
            vmem_limit_bytes=vmem_limit,
        ),
        cost_estimate=cost,
    )(x3, g2, b2)

    return out.reshape(orig_shape)


def _reference_layer_norm(x, gamma=None, beta=None, eps=1e-5):
    """Pure-JAX reference implementing the exact PyTorch module semantics."""
    N = x.shape[0]
    xf = x.reshape(N, -1).astype(jnp.float32)
    n = xf.shape[1]
    mean = jnp.mean(xf, axis=1)
    var = jnp.sum((xf - mean[:, None]) ** 2, axis=1) / max(n - 1, 1)  # unbiased
    std = jnp.sqrt(var)
    bshape = (N,) + (1,) * (x.ndim - 1)
    y = (x.astype(jnp.float32) - mean.reshape(bshape)) / (std.reshape(bshape) + eps)
    if gamma is not None:
        ashape = (1, -1) + (1,) * (x.ndim - 2)
        bt = beta if beta is not None else jnp.zeros_like(jnp.asarray(gamma))
        y = y * jnp.asarray(gamma).reshape(ashape) + jnp.asarray(bt).reshape(ashape)
    return y.astype(x.dtype)


if __name__ == "__main__":
    key = jax.random.PRNGKey(0)
    kx, kg = jax.random.split(key)

    # Shapes consistent with the module: 4D NCHW input, per-channel affine.
    N, C, H, W = 2, 4, 16, 16
    x = jax.random.normal(kx, (N, C, H, W), jnp.float32)
    gamma = jax.random.uniform(kg, (C,), jnp.float32)   # torch .uniform_() init
    beta = jnp.zeros((C,), jnp.float32)                 # torch zeros init

    out = jax.block_until_ready(layer_norm(x, gamma, beta, eps=1e-5))
    ref = jax.block_until_ready(_reference_layer_norm(x, gamma, beta, eps=1e-5))

    assert out.shape == x.shape
    assert jnp.allclose(out, ref, rtol=1e-4, atol=1e-4), "mismatch vs reference"

    print("KERNEL_OK")
</pallas_src>

<mosaic_0001>
module attributes {stable_mosaic.version = 11 : i64} {
  func.func @kernel(%arg0: i32, %arg1: memref<1x8x128xf32, #tpu.memory_space<vmem>>, %arg2: memref<8x128xf32, #tpu.memory_space<vmem>>, %arg3: memref<8x128xf32, #tpu.memory_space<vmem>>, %arg4: memref<1x8x128xf32, #tpu.memory_space<vmem>>) attributes {dimension_semantics = [#tpu.dimension_semantics<parallel>], iteration_bounds = array<i64: 2>, scalar_prefetch = 0 : i64, scratch_operands = 0 : i64, tpu.core_type = #tpu.core_type<tc>, window_params = [{transform_indices = @transform_0, window_bounds = array<i64: 1, 8, 128>}, {pipeline_mode = #tpu.pipeline_mode<synchronous>, transform_indices = @transform_1, window_bounds = array<i64: 8, 128>}, {pipeline_mode = #tpu.pipeline_mode<synchronous>, transform_indices = @transform_2, window_bounds = array<i64: 8, 128>}, {transform_indices = @transform_3, window_bounds = array<i64: 1, 8, 128>}]} {
    %c0 = arith.constant 0 : index
    %c0_0 = arith.constant 0 : index
    %c0_1 = arith.constant 0 : index
    %0 = vector.load %arg1[%c0, %c0_0, %c0_1] : memref<1x8x128xf32, #tpu.memory_space<vmem>>, vector<1x8x128xf32>
    %cst = arith.constant dense<0.000000e+00> : vector<1xf32>
    %1 = vector.multi_reduction <add>, %0, %cst [1, 2] : vector<1x8x128xf32> to vector<1xf32>
    %2 = vector.shape_cast %1 : vector<1xf32> to vector<1x1x1xf32>
    %cst_2 = arith.constant 9.765625E-4 : f32
    %3 = vector.broadcast %cst_2 : f32 to vector<1x1x1xf32>
    %4 = arith.mulf %2, %3 : vector<1x1x1xf32>
    %5 = vector.broadcast %4 : vector<1x1x1xf32> to vector<1x8x128xf32>
    %6 = arith.subf %0, %5 : vector<1x8x128xf32>
    %7 = arith.mulf %6, %6 : vector<1x8x128xf32>
    %cst_3 = arith.constant dense<0.000000e+00> : vector<1xf32>
    %8 = vector.multi_reduction <add>, %7, %cst_3 [1, 2] : vector<1x8x128xf32> to vector<1xf32>
    %9 = vector.shape_cast %8 : vector<1xf32> to vector<1x1x1xf32>
    %cst_4 = arith.constant 9.77517105E-4 : f32
    %10 = vector.broadcast %cst_4 : f32 to vector<1x1x1xf32>
    %11 = arith.mulf %9, %10 : vector<1x1x1xf32>
    %12 = math.sqrt %11 : vector<1x1x1xf32>
    %cst_5 = arith.constant 9.99999974E-6 : f32
    %13 = vector.broadcast %cst_5 : f32 to vector<1x1x1xf32>
    %14 = arith.addf %12, %13 : vector<1x1x1xf32>
    %cst_6 = arith.constant 1.000000e+00 : f32
    %15 = vector.broadcast %cst_6 : f32 to vector<1x1x1xf32>
    %16 = arith.divf %15, %14 : vector<1x1x1xf32>
    %17 = vector.broadcast %16 : vector<1x1x1xf32> to vector<1x8x128xf32>
    %18 = arith.mulf %6, %17 : vector<1x8x128xf32>
    %c0_7 = arith.constant 0 : index
    %c0_8 = arith.constant 0 : index
    %19 = vector.load %arg2[%c0_7, %c0_8] : memref<8x128xf32, #tpu.memory_space<vmem>>, vector<8x128xf32>
    %20 = vector.shape_cast %19 : vector<8x128xf32> to vector<1x8x128xf32>
    %21 = arith.mulf %18, %20 : vector<1x8x128xf32>
    %c0_9 = arith.constant 0 : index
    %c0_10 = arith.constant 0 : index
    %22 = vector.load %arg3[%c0_9, %c0_10] : memref<8x128xf32, #tpu.memory_space<vmem>>, vector<8x128xf32>
    %23 = vector.shape_cast %22 : vector<8x128xf32> to vector<1x8x128xf32>
    %24 = arith.addf %21, %23 : vector<1x8x128xf32>
    %c0_11 = arith.constant 0 : index
    %c0_12 = arith.constant 0 : index
    %c0_13 = arith.constant 0 : index
    %25 = vector.load %arg4[%c0_11, %c0_12, %c0_13] : memref<1x8x128xf32, #tpu.memory_space<vmem>>, vector<1x8x128xf32>
    tpu.vector_store %arg4[%c0_11, %c0_12, %c0_13], %24 {strides = array<i32>} : memref<1x8x128xf32, #tpu.memory_space<vmem>>, vector<1x8x128xf32>,
    return
  }
  func.func @transform_0(%arg0: i32) -> (i32, i32, i32) {
    %c0_i32 = arith.constant 0 : i32
    %c0_i32_0 = arith.constant 0 : i32
    %c0_i32_1 = arith.constant 0 : i32
    return %arg0, %c0_i32, %c0_i32_0 : i32, i32, i32
  }
  func.func @transform_1(%arg0: i32) -> (i32, i32) {
    %c0_i32 = arith.constant 0 : i32
    %c0_i32_0 = arith.constant 0 : i32
    %c0_i32_1 = arith.constant 0 : i32
    return %c0_i32, %c0_i32_0 : i32, i32
  }
  func.func @transform_2(%arg0: i32) -> (i32, i32) {
    %c0_i32 = arith.constant 0 : i32
    %c0_i32_0 = arith.constant 0 : i32
    %c0_i32_1 = arith.constant 0 : i32
    return %c0_i32, %c0_i32_0 : i32, i32
  }
  func.func @transform_3(%arg0: i32) -> (i32, i32, i32) {
    %c0_i32 = arith.constant 0 : i32
    %c0_i32_0 = arith.constant 0 : i32
    %c0_i32_1 = arith.constant 0 : i32
    return %arg0, %c0_i32, %c0_i32_0 : i32, i32, i32
  }
}

</mosaic_0001>

<llo_original>
// kernel: tpu_custom_call.1
$region0: #{tpu_custom_call.1}
  #allocation0 [shape = 'u32[]', space=smem, size = 0x4, offset = 0x4, fixed_abs, tag = 'smem constant byte address 0x4 - core index']
  #allocation1 [shape = 'u32[144,128]{1,0:T(1,128)}', space=vmem, size = 0x12000, scoped, tag = 'internal scratch']
  %s0 = inlined_call_operand.hbm [shape: f32[2,8,128], index: 0, kind: input, shape index: {}]
  %s1 = inlined_call_operand.hbm [shape: f32[8,128], index: 1, kind: input, shape index: {}]
  %s2 = inlined_call_operand.hbm [shape: f32[8,128], index: 2, kind: input, shape index: {}]
  %s3 = inlined_call_operand.hbm [shape: f32[2,8,128], index: 3, kind: output, shape index: {}]
  %s4 = sld [smem:[#allocation0]]
  $region57: #{tpu_custom_call.1} parent=0
    _
  %s6 = ssub.s32 1, %s4
  %s7 = scalar_select 0, %s6, %s4
  $region1: #{tpu_custom_call.1} parent=0
    #allocation2 [shape = 'u8[8192]{0}', space=vmem, size = 0x2000, scoped, tag = 'input window, operand 0']
    #allocation3 [shape = 's32[2]{0}', space=sflag, size = 0x8, scoped, tag = 'scoped memory for tpu_custom_call.1']
    #allocation4 [shape = 's32[2]{0}', space=sflag, size = 0x8, scoped, tag = 'scoped memory for tpu_custom_call.1']
    #allocation5 [shape = 'u8[4096]{0}', space=vmem, size = 0x1000, scoped, tag = 'input window, operand 1, single buffered']
    #allocation6 [shape = 's32[1]{0}', space=sflag, size = 0x4, scoped, tag = 'scoped memory for tpu_custom_call.1']
    #allocation7 [shape = 'u8[4096]{0}', space=vmem, size = 0x1000, scoped, tag = 'input window, operand 2, single buffered']
    #allocation8 [shape = 'u8[8192]{0}', space=vmem, size = 0x2000, scoped, tag = 'output window, operand 0']
    %8 = vsyncpa [#allocation3], 0
    %s9 = scalar_lea.sflag [#allocation3], 1
    %10 = vsyncpa %s9, 0
    %11 = vsyncpa [#allocation6], 0
    %12 = vsyncpa [#allocation4], 0
    %s13 = scalar_lea.sflag [#allocation4], 1
    %14 = vsyncpa %s13, 0
    loop: start=0, step=1, limit=4
    $region2: #{tpu_custom_call.1} parent=1 // loop_pre_header
      _
    $region3: #{tpu_custom_call.1} parent=1 // loop_header
      %s16 = sphi 0, %s20
      %p17 = scmp.ge.s32.totalorder %s16, 4
      %s26 = sphi 0, %s28
      %s29 = sphi 0, %s26
      %s30 = sphi 0, %s29
      %s46 = sphi 0, %s30
      %s50 = sphi 0, %s50
      %s52 = sphi 0, %s50
      %s53 = sphi 0, %s52
      %s67 = sphi 0, %s53
      %s71 = sphi 0, %s71
      %s73 = sphi 0, %s71
      %s74 = sphi 0, %s73
      %s88 = sphi 0, %s74
      %s94 = sphi 0, %s96
      %s97 = sphi 0, %s94
      %s98 = sphi 0, %s97
      %s114 = sphi 0, %s98
    $region4: #{tpu_custom_call.1} parent=1 // loop_header_branch
      %19 = sbr.rel (%p17) target = $region8
    $region5: #{tpu_custom_call.1} parent=1 // loop_body
      %s21 = ssub.s32 %s16, 1
      %s22 = ssub.s32 %s16, 2
      %s23 = sadd.s32 %s16, 1
      %s24 = ssub.s32 %s16, %s23
      %p25 = scmp.eq.s32.totalorder %s24, 0
      %s27 = sadd.s32 %s26, 1
      %s28 = scalar_select %p25, %s26, %s27
      %p31 = pneg %p25
      %p32 = scmp.eq.s32.totalorder %s16, 1
      %p33 = por %p31, %p32
      %p34 = scmp.ne.s32.totalorder %s26, %s29
      %p35 = scmp.eq.s32.totalorder %s16, 0
      %p36 = por %p34, %p35
      %p37 = scmp.ne.s32.totalorder %s26, %s29
      %p38 = scmp.eq.s32.totalorder %s21, 1
      %p39 = por %p37, %p38
      %p40 = scmp.ne.s32.totalorder %s29, %s30
      %p41 = scmp.eq.s32.totalorder %s21, 0
      %p42 = por %p40, %p41
      %p43 = scmp.ne.s32.totalorder %s29, %s30
      %p44 = scmp.eq.s32.totalorder %s22, 1
      %p45 = por %p43, %p44
      %p47 = scmp.ne.s32.totalorder %s30, %s46
      %p48 = scmp.eq.s32.totalorder %s22, 0
      %p49 = por %p47, %p48
      %s51 = sadd.s32 %s50, 1
      %p54 = scmp.eq.s32.totalorder %s16, 1
      %p55 = scmp.ne.s32.totalorder %s50, %s52
      %p56 = scmp.eq.s32.totalorder %s16, 0
      %p57 = por %p55, %p56
      %p58 = scmp.ne.s32.totalorder %s50, %s52
      %p59 = scmp.eq.s32.totalorder %s21, 1
      %p60 = por %p58, %p59
      %p61 = scmp.ne.s32.totalorder %s52, %s53
      %p62 = scmp.eq.s32.totalorder %s21, 0
      %p63 = por %p61, %p62
      %p64 = scmp.ne.s32.totalorder %s52, %s53
      %p65 = scmp.eq.s32.totalorder %s22, 1
      %p66 = por %p64, %p65
      %p68 = scmp.ne.s32.totalorder %s53, %s67
      %p69 = scmp.eq.s32.totalorder %s22, 0
      %p70 = por %p68, %p69
      %s72 = sadd.s32 %s71, 1
      %p75 = scmp.eq.s32.totalorder %s16, 1
      %p76 = scmp.ne.s32.totalorder %s71, %s73
      %p77 = scmp.eq.s32.totalorder %s16, 0
      %p78 = por %p76, %p77
      %p79 = scmp.ne.s32.totalorder %s71, %s73
      %p80 = scmp.eq.s32.totalorder %s21, 1
      %p81 = por %p79, %p80
      %p82 = scmp.ne.s32.totalorder %s73, %s74
      %p83 = scmp.eq.s32.totalorder %s21, 0
      %p84 = por %p82, %p83
      %p85 = scmp.ne.s32.totalorder %s73, %s74
      %p86 = scmp.eq.s32.totalorder %s22, 1
      %p87 = por %p85, %p86
      %p89 = scmp.ne.s32.totalorder %s74, %s88
      %p90 = scmp.eq.s32.totalorder %s22, 0
      %p91 = por %p89, %p90
      %s92 = ssub.s32 %s16, %s23
      %p93 = scmp.eq.s32.totalorder %s92, 0
      %s95 = sadd.s32 %s94, 1
      %s96 = scalar_select %p93, %s94, %s95
      %p99 = pneg %p93
      %p100 = scmp.eq.s32.totalorder %s16, 1
      %p101 = por %p99, %p100
      %p102 = scmp.ne.s32.totalorder %s94, %s97
      %p103 = scmp.eq.s32.totalorder %s16, 0
      %p104 = por %p102, %p103
      %p105 = scmp.ne.s32.totalorder %s94, %s97
      %p106 = scmp.eq.s32.totalorder %s21, 1
      %p107 = por %p105, %p106
      %p108 = scmp.ne.s32.totalorder %s97, %s98
      %p109 = scmp.eq.s32.totalorder %s21, 0
      %p110 = por %p108, %p109
      %p111 = scmp.ne.s32.totalorder %s97, %s98
      %p112 = scmp.eq.s32.totalorder %s22, 1
      %p113 = por %p111, %p112
      %p115 = scmp.ne.s32.totalorder %s98, %s114
      %p116 = scmp.eq.s32.totalorder %s22, 0
      %p117 = por %p115, %p116
      %p118 = scmp.le.s32.totalorder 1, %s16
      %p119 = scmp.lt.s32.totalorder %s16, 3
      %p120 = pnand %p118, %p119
      %p121 = pneg %p120
      // Predicated region
      $region9: #{tpu_custom_call.1} parent=5 // pred_check
        _
      $region10: #{tpu_custom_call.1} parent=5 // pred_check_branch
        %123 = sbr.rel (%p120) target = $region12
      $region11: #{tpu_custom_call.1} parent=5 // pred_region
        %s124 = ssub.s32 %s16, 1
        // Predicated region
        $region13: #{tpu_custom_call.1} parent=11 // pred_check
          %p125 = pneg %p63
        $region14: #{tpu_custom_call.1} parent=11 // pred_check_branch
          %127 = sbr.rel (%p125) target = $region16
        $region15: #{tpu_custom_call.1} parent=11 // pred_region
          %s129 = ssub.s32 128, 128
          %130 = vsyncadd [#allocation6], %s129
          %s132 = sshll.u32 [#allocation5], 4
          %s133 = int_to_ptr.vmem [resolvable:$true] %s132
          %135 = dma.hbm_to_vmem [thread:$0]  %s1, 128, %s133, [#allocation6]
        $region16: #{tpu_custom_call.1} parent=11 // pred_fallthru
          _
        // Predicated region
        $region17: #{tpu_custom_call.1} parent=11 // pred_check
          %p136 = pneg %p84
        $region18: #{tpu_custom_call.1} parent=11 // pred_check_branch
          %138 = sbr.rel (%p136) target = $region20
        $region19: #{tpu_custom_call.1} parent=11 // pred_region
          %s140 = ssub.s32 128, 128
          %141 = vsyncadd [#allocation6], %s140
          %s143 = sshll.u32 [#allocation7], 4
          %s144 = int_to_ptr.vmem [resolvable:$true] %s143
          %146 = dma.hbm_to_vmem [thread:$0]  %s2, 128, %s144, [#allocation6]
        $region20: #{tpu_custom_call.1} parent=11 // pred_fallthru
          _
      $region12: #{tpu_custom_call.1} parent=5 // pred_fallthru
        _
      %p147 = scmp.lt.s32.totalorder %s16, 2
      // Predicated region
      $region21: #{tpu_custom_call.1} parent=5 // pred_check
        %p148 = pneg %p147
      $region22: #{tpu_custom_call.1} parent=5 // pred_check_branch
        %150 = sbr.rel (%p148) target = $region24
      $region23: #{tpu_custom_call.1} parent=5 // pred_region
        // Predicated region
        $region25: #{tpu_custom_call.1} parent=23 // pred_check
          %p151 = pneg %p36
        $region26: #{tpu_custom_call.1} parent=23 // pred_check_branch
          %153 = sbr.rel (%p151) target = $region28
        $region27: #{tpu_custom_call.1} parent=23 // pred_region
          %s154 = sand.u32 %s26, 1
          %s155 = scalar_lea.sflag [#allocation3], %s154
          %s156 = sand.u32 %s26, 1
          %s157 = smul.addr %s156, 8
          %s158 = scalar_lea.vmem [#allocation2], %s157
          %s160 = ssub.s32 128, 128
          %161 = vsyncadd %s155, %s160
          %s162 = smul.addr %s16, 128
          %s163 = scalar_lea.hbm %s0, %s162
          %s165 = sshll.u32 %s158, 4
          %s166 = int_to_ptr.vmem [resolvable:$true] %s165
          %168 = dma.hbm_to_vmem [thread:$0]  %s163, 128, %s166, %s155
        $region28: #{tpu_custom_call.1} parent=23 // pred_fallthru
          _
      $region24: #{tpu_custom_call.1} parent=5 // pred_fallthru
        _
      %p169 = scmp.le.s32.totalorder 1, %s16
      %p170 = scmp.lt.s32.totalorder %s16, 3
      %p171 = pnand %p169, %p170
      %p172 = pneg %p171
      // Predicated region
      $region29: #{tpu_custom_call.1} parent=5 // pred_check
        _
      $region30: #{tpu_custom_call.1} parent=5 // pred_check_branch
        %174 = sbr.rel (%p171) target = $region32
      $region31: #{tpu_custom_call.1} parent=5 // pred_region
        %s175 = ssub.s32 %s16, 1
        %s176 = sand.u32 %s29, 1
        %s177 = scalar_lea.sflag [#allocation3], %s176
        %s178 = sand.u32 %s29, 1
        %s179 = smul.addr %s178, 8
        %s180 = scalar_lea.vmem [#allocation2], %s179
        // Predicated region
        $region33: #{tpu_custom_call.1} parent=31 // pred_check
          %p181 = pneg %p42
        $region34: #{tpu_custom_call.1} parent=31 // pred_check_branch
          %183 = sbr.rel (%p181) target = $region36
        $region35: #{tpu_custom_call.1} parent=31 // pred_region
          %184 = dma.done %s177, 128
        $region36: #{tpu_custom_call.1} parent=31 // pred_fallthru
          _
        // Predicated region
        $region37: #{tpu_custom_call.1} parent=31 // pred_check
          %p185 = pneg %p63
        $region38: #{tpu_custom_call.1} parent=31 // pred_check_branch
          %187 = sbr.rel (%p185) target = $region40
        $region39: #{tpu_custom_call.1} parent=31 // pred_region
          %188 = dma.done [#allocation6], 128
        $region40: #{tpu_custom_call.1} parent=31 // pred_fallthru
          _
        // Predicated region
        $region41: #{tpu_custom_call.1} parent=31 // pred_check
          %p189 = pneg %p84
        $region42: #{tpu_custom_call.1} parent=31 // pred_check_branch
          %191 = sbr.rel (%p189) target = $region44
        $region43: #{tpu_custom_call.1} parent=31 // pred_region
          %192 = dma.done [#allocation6], 128
        $region44: #{tpu_custom_call.1} parent=31 // pred_fallthru
          _
        %s193 = sand.u32 %s29, 1
        %s194 = scalar_lea.sflag [#allocation3], %s193
        %s195 = sand.u32 %s29, 1
        %s196 = smul.addr %s195, 8
        %s197 = scalar_lea.vmem [#allocation2], %s196
        %p198 = pneg %p42
        %p199 = pneg %p39
        %p200 = pneg %p63
        %p201 = pneg %p60
        %p202 = pneg %p84
        %p203 = pneg %p81
        %p204 = pneg %p110
        %p205 = pneg %p107
        %s206 = sand.u32 %s97, 1
        %s207 = scalar_lea.sflag [#allocation4], %s206
        %s208 = sand.u32 %s97, 1
        %s209 = smul.addr %s208, 8
        %s210 = scalar_lea.vmem [#allocation8], %s209
        %v211 = vld [vmem:[%s180] sm:$0xff]
        %212 = vadd.xlane.f32.xlu0 %v211
        %v213 = vpop.xlane.xlu0 %212
        %v214 = vrot.slane %v213, 4
        %v215 = vadd.f32 %v213, %v214
        %v216 = vrot.slane %v215, 2
        %v217 = vadd.f32 %v215, %v216
        %v218 = vrot.slane %v217, 1
        %v219 = vadd.f32 %v217, %v218
        %v220 = vmul.f32 %v219, 0.0009765625
        %v221 = vsub.f32 %v211, %v220
        %v222 = vmul.f32 %v221, %v221
        %223 = vadd.xlane.f32.xlu0 %v222
        %v224 = vpop.xlane.xlu0 %223
        %v225 = vrot.slane %v224, 4
        %v226 = vadd.f32 %v224, %v225
        %v227 = vrot.slane %v226, 2
        %v228 = vadd.f32 %v226, %v227
        %v229 = vrot.slane %v228, 1
        %v230 = vadd.f32 %v228, %v229
        %v231 = vmul.f32 %v230, 0.0009775171
        %v232 = vrsqrt.pop %v231
        %v233 = vmul.f32 %v231, %v232
        %vm234 = vcmp.eq.f32.partialorder %v231, inf
        %v235 = vsel %vm234, %v231, %v233
        %vm236 = vcmp.eq.f32.partialorder %v231, 0.0
        %v237 = vand.u32 %v231, 2147483648
        %v238 = vsel %vm236, %v237, %v235
        %v239 = vadd.f32 %v238, 1e-05
        %v240 = vrcp.pop %v239
        %v241 = vmul.f32 1.0, %v240
        %v242 = vmul.f32 %v221, %v241
        %v243 = vld [vmem:[#allocation5] sm:$0xff]
        %v244 = vmul.f32 %v242, %v243
        %v245 = vld [vmem:[#allocation7] sm:$0xff]
        %v246 = vadd.f32 %v244, %v245
        %247 = vst [vmem:[%s210] sm:$0xff] %v246
        %s248 = sand.u32 %s97, 1
        %s249 = scalar_lea.sflag [#allocation4], %s248
        %s250 = sand.u32 %s97, 1
        %s251 = smul.addr %s250, 8
        %s252 = scalar_lea.vmem [#allocation8], %s251
        // Predicated region
        $region45: #{tpu_custom_call.1} parent=31 // pred_check
          %p253 = pneg %p107
        $region46: #{tpu_custom_call.1} parent=31 // pred_check_branch
          %255 = sbr.rel (%p253) target = $region48
        $region47: #{tpu_custom_call.1} parent=31 // pred_region
          %s257 = ssub.s32 128, 128
          %258 = vsyncadd %s249, %s257
          %s259 = smul.addr %s21, 128
          %s260 = scalar_lea.hbm %s3, %s259
          %s262 = sshll.u32 %s252, 4
          %s263 = int_to_ptr.vmem [resolvable:$true] %s262
          %265 = dma.vmem_to_hbm [thread:$0]  %s263, 128, %s260, %s249
        $region48: #{tpu_custom_call.1} parent=31 // pred_fallthru
          _
      $region32: #{tpu_custom_call.1} parent=5 // pred_fallthru
        _
      %p266 = scmp.le.s32.totalorder 2, %s16
      // Predicated region
      $region49: #{tpu_custom_call.1} parent=5 // pred_check
        %p267 = pneg %p266
      $region50: #{tpu_custom_call.1} parent=5 // pred_check_branch
        %269 = sbr.rel (%p267) target = $region52
      $region51: #{tpu_custom_call.1} parent=5 // pred_region
        %s270 = ssub.s32 %s16, 2
        // Predicated region
        $region53: #{tpu_custom_call.1} parent=51 // pred_check
          %p271 = pneg %p113
        $region54: #{tpu_custom_call.1} parent=51 // pred_check_branch
          %273 = sbr.rel (%p271) target = $region56
        $region55: #{tpu_custom_call.1} parent=51 // pred_region
          %s274 = sand.u32 %s98, 1
          %s275 = scalar_lea.sflag [#allocation4], %s274
          %s276 = sand.u32 %s98, 1
          %s277 = smul.addr %s276, 8
          %s278 = scalar_lea.vmem [#allocation8], %s277
          %279 = dma.done %s275, 128
        $region56: #{tpu_custom_call.1} parent=51 // pred_fallthru
          _
      $region52: #{tpu_custom_call.1} parent=5 // pred_fallthru
        _
    $region6: #{tpu_custom_call.1} parent=1 // loop_footer
      %s20 = sadd.s32 1, %s16
    $region7: #{tpu_custom_call.1} parent=1 // loop_footer_branch
      %15 = sbr.rel target = $region3
    $region8: #{tpu_custom_call.1} parent=1 // loop_exit
      _
    %280 = vsyncpa [#allocation3], 1
    %s281 = scalar_lea.sflag [#allocation3], 1
    %282 = vsyncpa %s281, 1
    %283 = vsyncpa [#allocation6], 1
    %284 = vsyncpa [#allocation4], 1
    %s285 = scalar_lea.sflag [#allocation4], 1
    %286 = vsyncpa %s285, 1

</llo_original>
